<compile_context>
chip_gen: v6e
topology: v6e:2x2x1
jax: 0.10.0
libtpu: 0.0.40
codegen_flags: <defaults>
</compile_context>

<pallas_src>
import jax
import jax.numpy as jnp
from jax import lax
from jax.experimental import pallas as pl
from jax.experimental.pallas import tpu as pltpu

HIDDEN_SIZE = 128
LANE = 128


def _round_up(n, m):
    return ((n + m - 1) // m) * m


def policy_kernel(x_ref, w1_ref, b1_ref, w2_ref, b2_ref, o_ref):
    """One batch tile; batch ends up on the lane axis of the output.

    x_ref  : (TB, S) f32   states, un-transposed (batch on sublanes)
    w1_ref : (H, S)  f32   nn.Linear layout (out_features, in_features)
    b1_ref : (H, 1)  f32
    w2_ref : (A, H)  f32
    b2_ref : (A, 1)  f32
    o_ref  : (A, TB) f32   softmax probabilities, lane-dense
    """
    # h_T = W1 @ x^T : contract the state dim (last dim of both operands).
    # The operand staging/transpose happens in VMEM/MXU, not as an XLA pass.
    h = lax.dot_general(
        w1_ref[...], x_ref[...],
        dimension_numbers=(((1,), (1,)), ((), ())),
        preferred_element_type=jnp.float32)                     # (H, TB)
    h = jnp.maximum(h + b1_ref[...], 0.0)                       # bias + ReLU

    # logits_T = W2 @ h_T  -> (A, TB)
    logits = jnp.dot(w2_ref[...], h,
                     preferred_element_type=jnp.float32) + b2_ref[...]

    # Numerically stable softmax over the action axis (axis 0).  Exact divide:
    # the kernel is DMA/overhead bound, so exact normalization is free and the
    # probabilities sum to 1 up to f32 rounding (per-column, so any garbage in
    # padded tail columns of a partial edge block stays confined and is masked
    # out on the store anyway).
    m = jnp.max(logits, axis=0, keepdims=True)
    e = jnp.exp(logits - m)
    denom = jnp.sum(e, axis=0, keepdims=True)
    o_ref[...] = (e / denom).astype(o_ref.dtype)


def _pick_tiling(batch, n_tiles, max_tb):
    """Adaptive batch tile size / grid length.

    Targets `n_tiles` lane-aligned tiles (>=2 keeps both v7x TensorCores busy),
    capped at `max_tb` for VMEM; falls back to one full-batch tile when that
    fits, which sidesteps all (8,128) block rules and needs no padding.
    """
    target = _round_up(pl.cdiv(batch, max(n_tiles, 1)), LANE)
    tb = min(target, max_tb)
    if tb >= batch:
        return batch, 1                 # single tile == full array dims
    return tb, pl.cdiv(batch, tb)       # multiple-of-128 tiles; last is partial


def policy_forward(x, w1, b1, w2, b2, *, n_tiles=2, max_tb=8192,
                   lane_major_out=False, vmem_limit_bytes=32 * 1024 * 1024):
    """softmax(relu(x @ W1^T + b1) @ W2^T + b2, axis=1).

    x  : (B, S) f32
    w1 : (H, S) f32, b1 : (H,) f32   (PyTorch nn.Linear layout)
    w2 : (A, H) f32, b2 : (A,) f32
    Returns (B, A) probabilities, or the lane-dense (A, B) layout when
    lane_major_out=True (saves one XLA transpose pass for large rollouts).
    """
    B, S = x.shape
    H, S_ = w1.shape
    A, H_ = w2.shape
    assert S_ == S and H_ == H and H == HIDDEN_SIZE

    tb, grid_len = _pick_tiling(B, n_tiles, max_tb)

    b1_2d = b1.reshape(H, 1).astype(jnp.float32)
    b2_2d = b2.reshape(A, 1).astype(jnp.float32)

    probs_t = pl.pallas_call(
        policy_kernel,
        out_shape=jax.ShapeDtypeStruct((A, B), jnp.float32),
        grid=(grid_len,),
        in_specs=[
            # Batch tiles of x stream through VMEM (auto double-buffered).
            pl.BlockSpec((tb, S), lambda i: (i, 0)),
            # Weights / biases: constant index maps -> VMEM-resident across steps.
            pl.BlockSpec((H, S), lambda i: (0, 0)),
            pl.BlockSpec((H, 1), lambda i: (0, 0)),
            pl.BlockSpec((A, H), lambda i: (0, 0)),
            pl.BlockSpec((A, 1), lambda i: (0, 0)),
        ],
        # Lane-dense output tile: unmasked full-lane stores + contiguous DMA.
        out_specs=pl.BlockSpec((A, tb), lambda i: (0, i)),
        compiler_params=pltpu.CompilerParams(
            dimension_semantics=("parallel",),   # shard batch tiles across TCs (v7x)
            vmem_limit_bytes=vmem_limit_bytes,
        ),
    )(x.astype(jnp.float32), w1.astype(jnp.float32), b1_2d,
      w2.astype(jnp.float32), b2_2d)

    if lane_major_out:
        return probs_t                     # (A, B), consumer fuses/avoids transpose
    return jnp.transpose(probs_t)          # PyTorch contract: (B, A)


def init_params(key, state_size, action_size):
    # nn.Linear-style uniform(-1/sqrt(fan_in), 1/sqrt(fan_in)) init, PyTorch
    # layout: weight (out_features, in_features), bias (out_features,).
    k1, k2, k3, k4 = jax.random.split(key, 4)
    bound1 = 1.0 / jnp.sqrt(state_size)
    bound2 = 1.0 / jnp.sqrt(HIDDEN_SIZE)
    w1 = jax.random.uniform(k1, (HIDDEN_SIZE, state_size), jnp.float32, -bound1, bound1)
    b1 = jax.random.uniform(k2, (HIDDEN_SIZE,), jnp.float32, -bound1, bound1)
    w2 = jax.random.uniform(k3, (action_size, HIDDEN_SIZE), jnp.float32, -bound2, bound2)
    b2 = jax.random.uniform(k4, (action_size,), jnp.float32, -bound2, bound2)
    return w1, b1, w2, b2


def _reference(x, w1, b1, w2, b2):
    h = jnp.maximum(x @ w1.T + b1[None, :], 0.0)
    return jax.nn.softmax(h @ w2.T + b2[None, :], axis=1)


if __name__ == "__main__":
    key = jax.random.PRNGKey(0)
    k_x, k_x2, k_p = jax.random.split(key, 3)

    state_size, action_size = 4, 2   # CartPole-like

    w1, b1, w2, b2 = init_params(k_p, state_size, action_size)
    fwd = jax.jit(policy_forward)

    # Case 1: tiny batch -> single full-batch tile (full-dim blocks).
    x_small = jax.random.normal(k_x, (8, state_size), jnp.float32)
    probs_small = jax.block_until_ready(fwd(x_small, w1, b1, w2, b2))

    # Case 2: batch that exercises the multi-tile path with a partial edge block
    # (tb = 256, grid = 2, last block masked).
    x_big = jax.random.normal(k_x2, (300, state_size), jnp.float32)
    probs_big = jax.block_until_ready(fwd(x_big, w1, b1, w2, b2))

    for x_in, probs in ((x_small, probs_small), (x_big, probs_big)):
        ref = _reference(x_in, w1, b1, w2, b2)
        assert probs.shape == (x_in.shape[0], action_size)
        # MXU default-precision matmuls vs. XLA reference: loose elementwise tol,
        # but exact in-kernel normalization -> rows sum to 1 tightly.
        assert bool(jnp.allclose(probs, ref, atol=1e-2, rtol=1e-2))
        assert bool(jnp.allclose(jnp.sum(probs, axis=1), 1.0, atol=1e-5))

    print("KERNEL_OK")
</pallas_src>

<mosaic_0001>
module attributes {stable_mosaic.version = 11 : i64} {
  func.func @policy_kernel(%arg0: i32, %arg1: memref<8x4xf32, #tpu.memory_space<vmem>>, %arg2: memref<128x4xf32, #tpu.memory_space<vmem>>, %arg3: memref<128x1xf32, #tpu.memory_space<vmem>>, %arg4: memref<2x128xf32, #tpu.memory_space<vmem>>, %arg5: memref<2x1xf32, #tpu.memory_space<vmem>>, %arg6: memref<2x8xf32, #tpu.memory_space<vmem>>) attributes {dimension_semantics = [#tpu.dimension_semantics<parallel>], iteration_bounds = array<i64: 1>, scalar_prefetch = 0 : i64, scratch_operands = 0 : i64, tpu.core_type = #tpu.core_type<tc>, window_params = [{transform_indices = @transform_0, window_bounds = array<i64: 8, 4>}, {pipeline_mode = #tpu.pipeline_mode<synchronous>, transform_indices = @transform_1, window_bounds = array<i64: 128, 4>}, {pipeline_mode = #tpu.pipeline_mode<synchronous>, transform_indices = @transform_2, window_bounds = array<i64: 128, 1>}, {pipeline_mode = #tpu.pipeline_mode<synchronous>, transform_indices = @transform_3, window_bounds = array<i64: 2, 128>}, {pipeline_mode = #tpu.pipeline_mode<synchronous>, transform_indices = @transform_4, window_bounds = array<i64: 2, 1>}, {transform_indices = @transform_5, window_bounds = array<i64: 2, 8>}]} {
    %c0 = arith.constant 0 : index
    %c0_0 = arith.constant 0 : index
    %0 = vector.load %arg2[%c0, %c0_0] : memref<128x4xf32, #tpu.memory_space<vmem>>, vector<128x4xf32>
    %c0_1 = arith.constant 0 : index
    %c0_2 = arith.constant 0 : index
    %1 = vector.load %arg1[%c0_1, %c0_2] : memref<8x4xf32, #tpu.memory_space<vmem>>, vector<8x4xf32>
    %cst = arith.constant dense<0.000000e+00> : vector<128x8xf32>
    %2 = tpu.matmul %0, %1, %cst {dimension_numbers = #tpu.dot_dimension_numbers<[1], [1], [0], [0], [0, 0, 1, 0], [], []>} : vector<128x4xf32>, vector<8x4xf32>, vector<128x8xf32> -> vector<128x8xf32>
    %c0_3 = arith.constant 0 : index
    %c0_4 = arith.constant 0 : index
    %3 = vector.load %arg3[%c0_3, %c0_4] : memref<128x1xf32, #tpu.memory_space<vmem>>, vector<128x1xf32>
    %4 = vector.broadcast %3 : vector<128x1xf32> to vector<128x8xf32>
    %5 = arith.addf %2, %4 : vector<128x8xf32>
    %cst_5 = arith.constant 0.000000e+00 : f32
    %6 = vector.broadcast %cst_5 : f32 to vector<128x8xf32>
    %7 = arith.maximumf %5, %6 : vector<128x8xf32>
    %c0_6 = arith.constant 0 : index
    %c0_7 = arith.constant 0 : index
    %8 = vector.load %arg4[%c0_6, %c0_7] : memref<2x128xf32, #tpu.memory_space<vmem>>, vector<2x128xf32>
    %cst_8 = arith.constant dense<0.000000e+00> : vector<2x8xf32>
    %9 = tpu.matmul %8, %7, %cst_8 {dimension_numbers = #tpu.dot_dimension_numbers<[1], [0], [0], [1], [0, 0, 1, 1], [], []>} : vector<2x128xf32>, vector<128x8xf32>, vector<2x8xf32> -> vector<2x8xf32>
    %c0_9 = arith.constant 0 : index
    %c0_10 = arith.constant 0 : index
    %10 = vector.load %arg5[%c0_9, %c0_10] : memref<2x1xf32, #tpu.memory_space<vmem>>, vector<2x1xf32>
    %11 = vector.broadcast %10 : vector<2x1xf32> to vector<2x8xf32>
    %12 = arith.addf %9, %11 : vector<2x8xf32>
    %cst_11 = arith.constant dense<0xFF800000> : vector<8xf32>
    %13 = vector.multi_reduction <maximumf>, %12, %cst_11 [0] : vector<2x8xf32> to vector<8xf32>
    %14 = vector.shape_cast %13 : vector<8xf32> to vector<1x8xf32>
    %15 = vector.broadcast %14 : vector<1x8xf32> to vector<2x8xf32>
    %16 = arith.subf %12, %15 : vector<2x8xf32>
    %17 = math.exp %16 : vector<2x8xf32>
    %cst_12 = arith.constant dense<0.000000e+00> : vector<8xf32>
    %18 = vector.multi_reduction <add>, %17, %cst_12 [0] : vector<2x8xf32> to vector<8xf32>
    %19 = vector.shape_cast %18 : vector<8xf32> to vector<1x8xf32>
    %20 = vector.broadcast %19 : vector<1x8xf32> to vector<2x8xf32>
    %21 = arith.divf %17, %20 : vector<2x8xf32>
    %c0_13 = arith.constant 0 : index
    %c0_14 = arith.constant 0 : index
    %22 = vector.load %arg6[%c0_13, %c0_14] : memref<2x8xf32, #tpu.memory_space<vmem>>, vector<2x8xf32>
    tpu.vector_store %arg6[%c0_13, %c0_14], %21 {strides = array<i32>} : memref<2x8xf32, #tpu.memory_space<vmem>>, vector<2x8xf32>,
    return
  }
  func.func @transform_0(%arg0: i32) -> (i32, i32) {
    %c0_i32 = arith.constant 0 : i32
    %c0_i32_0 = arith.constant 0 : i32
    return %arg0, %c0_i32 : i32, i32
  }
  func.func @transform_1(%arg0: i32) -> (i32, i32) {
    %c0_i32 = arith.constant 0 : i32
    %c0_i32_0 = arith.constant 0 : i32
    %c0_i32_1 = arith.constant 0 : i32
    return %c0_i32, %c0_i32_0 : i32, i32
  }
  func.func @transform_2(%arg0: i32) -> (i32, i32) {
    %c0_i32 = arith.constant 0 : i32
    %c0_i32_0 = arith.constant 0 : i32
    %c0_i32_1 = arith.constant 0 : i32
    return %c0_i32, %c0_i32_0 : i32, i32
  }
  func.func @transform_3(%arg0: i32) -> (i32, i32) {
    %c0_i32 = arith.constant 0 : i32
    %c0_i32_0 = arith.constant 0 : i32
    %c0_i32_1 = arith.constant 0 : i32
    return %c0_i32, %c0_i32_0 : i32, i32
  }
  func.func @transform_4(%arg0: i32) -> (i32, i32) {
    %c0_i32 = arith.constant 0 : i32
    %c0_i32_0 = arith.constant 0 : i32
    %c0_i32_1 = arith.constant 0 : i32
    return %c0_i32, %c0_i32_0 : i32, i32
  }
  func.func @transform_5(%arg0: i32) -> (i32, i32) {
    %c0_i32 = arith.constant 0 : i32
    %c0_i32_0 = arith.constant 0 : i32
    return %c0_i32, %arg0 : i32, i32
  }
}

</mosaic_0001>

<llo_original>
// kernel: policy_forward.1
$region0: #{policy_forward.1}
  #allocation0 [shape = 'u32[]', space=smem, size = 0x4, offset = 0x4, fixed_abs, tag = 'smem constant byte address 0x4 - core index']
  #allocation1 [shape = 'u32[144,128]{1,0:T(1,128)}', space=vmem, size = 0x12000, scoped, tag = 'internal scratch']
  %s0 = inlined_call_operand.vmem [shape: f32[8,4], index: 0, kind: input, shape index: {}]
  %s1 = inlined_call_operand.vmem [shape: f32[128,4], index: 1, kind: input, shape index: {}]
  %s2 = inlined_call_operand.vmem [shape: f32[128,1], index: 2, kind: input, shape index: {}]
  %s3 = inlined_call_operand.vmem [shape: f32[2,128], index: 3, kind: input, shape index: {}]
  %s4 = inlined_call_operand.vmem [shape: f32[2,1], index: 4, kind: input, shape index: {}]
  %s5 = inlined_call_operand.hbm [shape: f32[2,8], index: 5, kind: output, shape index: {}]
  %s6 = sld [smem:[#allocation0]]
  $region30: #{policy_forward.1} parent=0
    _
  %s8 = ssub.s32 1, %s6
  %s9 = scalar_select 0, %s8, %s6
  $region1: #{policy_forward.1} parent=0
    #allocation2 [shape = 'u8[1024]{0}', space=vmem, size = 0x400, scoped, tag = 'output window, operand 0, single buffered']
    #allocation3 [shape = 's32[1]{0}', space=sflag, size = 0x4, scoped, tag = 'scoped memory for policy_forward.1']
    %10 = vsyncpa [#allocation3], 0
    // Predicated region
    $region2: #{policy_forward.1} parent=1 // pred_check
      _
    $region3: #{policy_forward.1} parent=1 // pred_check_branch
      %12 = sbr.rel (0) target = $region5
    $region4: #{policy_forward.1} parent=1 // pred_region
      _
    $region5: #{policy_forward.1} parent=1 // pred_fallthru
      _
    // Predicated region
    $region6: #{policy_forward.1} parent=1 // pred_check
      _
    $region7: #{policy_forward.1} parent=1 // pred_check_branch
      %14 = sbr.rel (0) target = $region9
    $region8: #{policy_forward.1} parent=1 // pred_region
      _
    $region9: #{policy_forward.1} parent=1 // pred_fallthru
      _
    // Predicated region
    $region10: #{policy_forward.1} parent=1 // pred_check
      _
    $region11: #{policy_forward.1} parent=1 // pred_check_branch
      %16 = sbr.rel (0) target = $region13
    $region12: #{policy_forward.1} parent=1 // pred_region
      _
    $region13: #{policy_forward.1} parent=1 // pred_fallthru
      _
    // Predicated region
    $region14: #{policy_forward.1} parent=1 // pred_check
      _
    $region15: #{policy_forward.1} parent=1 // pred_check_branch
      %18 = sbr.rel (0) target = $region17
    $region16: #{policy_forward.1} parent=1 // pred_region
      _
    $region17: #{policy_forward.1} parent=1 // pred_fallthru
      _
    // Predicated region
    $region18: #{policy_forward.1} parent=1 // pred_check
      _
    $region19: #{policy_forward.1} parent=1 // pred_check_branch
      %20 = sbr.rel (0) target = $region21
    $region20: #{policy_forward.1} parent=1 // pred_region
      _
    $region21: #{policy_forward.1} parent=1 // pred_fallthru
      _
    %v21 = vld [vmem:[%s1] sm:$0xff]
    %v22 = vld [vmem:[%s1 + $0x8] sm:$0xff]
    %v23 = vld [vmem:[%s1 + $0x10] sm:$0xff]
    %v24 = vld [vmem:[%s1 + $0x18] sm:$0xff]
    %v25 = vld [vmem:[%s1 + $0x20] sm:$0xff]
    %v26 = vld [vmem:[%s1 + $0x28] sm:$0xff]
    %v27 = vld [vmem:[%s1 + $0x30] sm:$0xff]
    %v28 = vld [vmem:[%s1 + $0x38] sm:$0xff]
    %v29 = vld [vmem:[%s1 + $0x40] sm:$0xff]
    %v30 = vld [vmem:[%s1 + $0x48] sm:$0xff]
    %v31 = vld [vmem:[%s1 + $0x50] sm:$0xff]
    %v32 = vld [vmem:[%s1 + $0x58] sm:$0xff]
    %v33 = vld [vmem:[%s1 + $0x60] sm:$0xff]
    %v34 = vld [vmem:[%s1 + $0x68] sm:$0xff]
    %v35 = vld [vmem:[%s1 + $0x70] sm:$0xff]
    %v36 = vld [vmem:[%s1 + $0x78] sm:$0xff]
    %v37 = vld [vmem:[%s0] sm:$0xff]
    %v38 = vld [vmem:[%s2] sm:$0xff]
    %v39 = vld [vmem:[%s2 + $0x8] sm:$0xff]
    %v40 = vld [vmem:[%s2 + $0x10] sm:$0xff]
    %v41 = vld [vmem:[%s2 + $0x18] sm:$0xff]
    %v42 = vld [vmem:[%s2 + $0x20] sm:$0xff]
    %v43 = vld [vmem:[%s2 + $0x28] sm:$0xff]
    %v44 = vld [vmem:[%s2 + $0x30] sm:$0xff]
    %v45 = vld [vmem:[%s2 + $0x38] sm:$0xff]
    %v46 = vld [vmem:[%s2 + $0x40] sm:$0xff]
    %v47 = vld [vmem:[%s2 + $0x48] sm:$0xff]
    %v48 = vld [vmem:[%s2 + $0x50] sm:$0xff]
    %v49 = vld [vmem:[%s2 + $0x58] sm:$0xff]
    %v50 = vld [vmem:[%s2 + $0x60] sm:$0xff]
    %v51 = vld [vmem:[%s2 + $0x68] sm:$0xff]
    %v52 = vld [vmem:[%s2 + $0x70] sm:$0xff]
    %v53 = vld [vmem:[%s2 + $0x78] sm:$0xff]
    %55 = vset.pattern.permute.xlu0 0
    %56 = vperm.xlu0 %55, %v38
    %v57 = vpop.permute.xlu0 %56
    %60 = vset.pattern.permute.xlu0 0
    %61 = vperm.xlu0 %60, %v39
    %v62 = vpop.permute.xlu0 %61
    %65 = vset.pattern.permute.xlu0 0
    %66 = vperm.xlu0 %65, %v40
    %v67 = vpop.permute.xlu0 %66
    %70 = vset.pattern.permute.xlu0 0
    %71 = vperm.xlu0 %70, %v41
    %v72 = vpop.permute.xlu0 %71
    %75 = vset.pattern.permute.xlu0 0
    %76 = vperm.xlu0 %75, %v42
    %v77 = vpop.permute.xlu0 %76
    %80 = vset.pattern.permute.xlu0 0
    %81 = vperm.xlu0 %80, %v43
    %v82 = vpop.permute.xlu0 %81
    %85 = vset.pattern.permute.xlu0 0
    %86 = vperm.xlu0 %85, %v44
    %v87 = vpop.permute.xlu0 %86
    %90 = vset.pattern.permute.xlu0 0
    %91 = vperm.xlu0 %90, %v45
    %v92 = vpop.permute.xlu0 %91
    %95 = vset.pattern.permute.xlu0 0
    %96 = vperm.xlu0 %95, %v46
    %v97 = vpop.permute.xlu0 %96
    %100 = vset.pattern.permute.xlu0 0
    %101 = vperm.xlu0 %100, %v47
    %v102 = vpop.permute.xlu0 %101
    %105 = vset.pattern.permute.xlu0 0
    %106 = vperm.xlu0 %105, %v48
    %v107 = vpop.permute.xlu0 %106
    %110 = vset.pattern.permute.xlu0 0
    %111 = vperm.xlu0 %110, %v49
    %v112 = vpop.permute.xlu0 %111
    %115 = vset.pattern.permute.xlu0 0
    %116 = vperm.xlu0 %115, %v50
    %v117 = vpop.permute.xlu0 %116
    %120 = vset.pattern.permute.xlu0 0
    %121 = vperm.xlu0 %120, %v51
    %v122 = vpop.permute.xlu0 %121
    %125 = vset.pattern.permute.xlu0 0
    %126 = vperm.xlu0 %125, %v52
    %v127 = vpop.permute.xlu0 %126
    %130 = vset.pattern.permute.xlu0 0
    %131 = vperm.xlu0 %130, %v53
    %v132 = vpop.permute.xlu0 %131
    %vm134 = vcmask 31744
    %v136 = vsel %vm134, %v21, 0
    %v139 = vsel %vm134, %v22, 0
    %v142 = vsel %vm134, %v23, 0
    %v145 = vsel %vm134, %v24, 0
    %v148 = vsel %vm134, %v25, 0
    %v151 = vsel %vm134, %v26, 0
    %v154 = vsel %vm134, %v27, 0
    %v157 = vsel %vm134, %v28, 0
    %v160 = vsel %vm134, %v29, 0
    %v163 = vsel %vm134, %v30, 0
    %v166 = vsel %vm134, %v31, 0
    %v169 = vsel %vm134, %v32, 0
    %v172 = vsel %vm134, %v33, 0
    %v175 = vsel %vm134, %v34, 0
    %v178 = vsel %vm134, %v35, 0
    %v181 = vsel %vm134, %v36, 0
    %v184 = vsel %vm134, %v37, 0
    %186 = vmatprep.subr.mxu0 0.0
    %187 = vmatpush1.xpose.msra.mxu0 0.0
    %188 = vmatprep.subr.mxu0 0.0
    %189 = vmatpush1.xpose.msra.mxu0 0.0
    %190 = vmatprep.subr.mxu0 0.0
    %191 = vmatpush1.xpose.msra.mxu0 0.0
    %192 = vmatprep.subr.mxu0 0.0
    %193 = vmatpush1.xpose.msra.mxu0 0.0
    %194 = vmatprep.subr.mxu0 0.0
    %195 = vmatpush1.xpose.msra.mxu0 0.0
    %196 = vmatprep.subr.mxu0 0.0
    %197 = vmatpush1.xpose.msra.mxu0 0.0
    %198 = vmatprep.subr.mxu0 0.0
    %199 = vmatpush1.xpose.msra.mxu0 0.0
    %200 = vmatprep.subr.mxu0 0.0
    %201 = vmatpush1.xpose.msra.mxu0 0.0
    %202 = vmatprep.subr.mxu0 0.0
    %203 = vmatpush1.xpose.msra.mxu0 0.0
    %204 = vmatprep.subr.mxu0 0.0
    %205 = vmatpush1.xpose.msra.mxu0 0.0
    %206 = vmatprep.subr.mxu0 0.0
    %207 = vmatpush1.xpose.msra.mxu0 0.0
    %208 = vmatprep.subr.mxu0 0.0
    %209 = vmatpush1.xpose.msra.mxu0 0.0
    %210 = vmatprep.subr.mxu0 0.0
    %211 = vmatpush1.xpose.msra.mxu0 0.0
    %212 = vmatprep.subr.mxu0 0.0
    %213 = vmatpush1.xpose.msra.mxu0 0.0
    %214 = vmatprep.subr.mxu0 0.0
    %215 = vmatpush1.xpose.msra.mxu0 0.0
    %216 = vmatprep.subr.mxu0 0.0
    %217 = vmatpush1.xpose.msra.mxu0 %v184
    %218 = vmatprep.subr.mxu0 0.0
    %219 = vmatpush2.xpose.msra.mxu0 0.0
    %220 = vmatprep.subr.mxu0 0.0
    %221 = vmatpush2.xpose.msra.mxu0 0.0
    %222 = vmatprep.subr.mxu0 0.0
    %223 = vmatpush2.xpose.msra.mxu0 0.0
    %224 = vmatprep.subr.mxu0 0.0
    %225 = vmatpush2.xpose.msra.mxu0 0.0
    %226 = vmatprep.subr.mxu0 0.0
    %227 = vmatpush2.xpose.msra.mxu0 0.0
    %228 = vmatprep.subr.mxu0 0.0
    %229 = vmatpush2.xpose.msra.mxu0 0.0
    %230 = vmatprep.subr.mxu0 0.0
    %231 = vmatpush2.xpose.msra.mxu0 0.0
    %232 = vmatprep.subr.mxu0 0.0
    %233 = vmatpush2.xpose.msra.mxu0 0.0
    %234 = vmatprep.subr.mxu0 0.0
    %235 = vmatpush2.xpose.msra.mxu0 0.0
    %236 = vmatprep.subr.mxu0 0.0
    %237 = vmatpush2.xpose.msra.mxu0 0.0
    %238 = vmatprep.subr.mxu0 0.0
    %239 = vmatpush2.xpose.msra.mxu0 0.0
    %240 = vmatprep.subr.mxu0 0.0
    %241 = vmatpush2.xpose.msra.mxu0 0.0
    %242 = vmatprep.subr.mxu0 0.0
    %243 = vmatpush2.xpose.msra.mxu0 0.0
    %244 = vmatprep.subr.mxu0 0.0
    %245 = vmatpush2.xpose.msra.mxu0 0.0
    %246 = vmatprep.subr.mxu0 0.0
    %247 = vmatpush2.xpose.msra.mxu0 0.0
    %248 = vmatprep.subr.mxu0 0.0
    %249 = vmatpush2.xpose.msra.mxu0 0.0
    %250 = vmatprep.mubr.f32.mxu0 0.0
    %251 = vmatmul.mubr.f32.gmra.mxu0 %v136
    %v252 = vpop.f32.mrf.mxu0
    %v253 = vadd.f32 %v57, %v252
    %v254 = vpop.f32.mrf.mxu0
    %255 = vmatprep.mubr.f32.mxu0 0.0
    %256 = vmatmul.mubr.f32.gmra.mxu0 %v139
    %v257 = vpop.f32.mrf.mxu0
    %v258 = vadd.f32 %v62, %v257
    %v259 = vpop.f32.mrf.mxu0
    %260 = vmatprep.mubr.f32.mxu0 0.0
    %261 = vmatmul.mubr.f32.gmra.mxu0 %v142
    %v262 = vpop.f32.mrf.mxu0
    %v263 = vadd.f32 %v67, %v262
    %v264 = vpop.f32.mrf.mxu0
    %265 = vmatprep.mubr.f32.mxu0 0.0
    %266 = vmatmul.mubr.f32.gmra.mxu0 %v145
    %v267 = vpop.f32.mrf.mxu0
    %v268 = vadd.f32 %v72, %v267
    %v269 = vpop.f32.mrf.mxu0
    %270 = vmatprep.mubr.f32.mxu0 0.0
    %271 = vmatmul.mubr.f32.gmra.mxu0 %v148
    %v272 = vpop.f32.mrf.mxu0
    %v273 = vadd.f32 %v77, %v272
    %v274 = vpop.f32.mrf.mxu0
    %275 = vmatprep.mubr.f32.mxu0 0.0
    %276 = vmatmul.mubr.f32.gmra.mxu0 %v151
    %v277 = vpop.f32.mrf.mxu0
    %v278 = vadd.f32 %v82, %v277
    %v279 = vpop.f32.mrf.mxu0
    %280 = vmatprep.mubr.f32.mxu0 0.0
    %281 = vmatmul.mubr.f32.gmra.mxu0 %v154
    %v282 = vpop.f32.mrf.mxu0
    %v283 = vadd.f32 %v87, %v282
    %v284 = vpop.f32.mrf.mxu0
    %285 = vmatprep.mubr.f32.mxu0 0.0
    %286 = vmatmul.mubr.f32.gmra.mxu0 %v157
    %v287 = vpop.f32.mrf.mxu0
    %v288 = vadd.f32 %v92, %v287
    %v289 = vpop.f32.mrf.mxu0
    %290 = vmatprep.mubr.f32.mxu0 0.0
    %291 = vmatmul.mubr.f32.gmra.mxu0 %v160
    %v292 = vpop.f32.mrf.mxu0
    %v293 = vadd.f32 %v97, %v292
    %v294 = vpop.f32.mrf.mxu0
    %295 = vmatprep.mubr.f32.mxu0 0.0
    %296 = vmatmul.mubr.f32.gmra.mxu0 %v163
    %v297 = vpop.f32.mrf.mxu0
    %v298 = vadd.f32 %v102, %v297
    %v299 = vpop.f32.mrf.mxu0
    %300 = vmatprep.mubr.f32.mxu0 0.0
    %301 = vmatmul.mubr.f32.gmra.mxu0 %v166
    %v302 = vpop.f32.mrf.mxu0
    %v303 = vadd.f32 %v107, %v302
    %v304 = vpop.f32.mrf.mxu0
    %305 = vmatprep.mubr.f32.mxu0 0.0
    %306 = vmatmul.mubr.f32.gmra.mxu0 %v169
    %v307 = vpop.f32.mrf.mxu0
    %v308 = vadd.f32 %v112, %v307
    %v309 = vpop.f32.mrf.mxu0
    %310 = vmatprep.mubr.f32.mxu0 0.0
    %311 = vmatmul.mubr.f32.gmra.mxu0 %v172
    %v312 = vpop.f32.mrf.mxu0
    %v313 = vadd.f32 %v117, %v312
    %v314 = vpop.f32.mrf.mxu0
    %315 = vmatprep.mubr.f32.mxu0 0.0
    %316 = vmatmul.mubr.f32.gmra.mxu0 %v175
    %v317 = vpop.f32.mrf.mxu0
    %v318 = vadd.f32 %v122, %v317
    %v319 = vpop.f32.mrf.mxu0
    %320 = vmatprep.mubr.f32.mxu0 0.0
    %321 = vmatmul.mubr.f32.gmra.mxu0 %v178
    %v322 = vpop.f32.mrf.mxu0
    %v323 = vadd.f32 %v127, %v322
    %v324 = vpop.f32.mrf.mxu0
    %325 = vmatprep.mubr.f32.mxu0 0.0
    %326 = vmatmul.mubr.f32.gmra.mxu0 %v181
    %v327 = vpop.f32.mrf.mxu0
    %v328 = vadd.f32 %v132, %v327
    %v329 = vpop.f32.mrf.mxu0
    %330 = vdwg.mxu0
    %v331 = vmax.f32 %v253, 0.0
    %v332 = vmax.f32 %v258, 0.0
    %v333 = vmax.f32 %v263, 0.0
    %v334 = vmax.f32 %v268, 0.0
    %v335 = vmax.f32 %v273, 0.0
    %v336 = vmax.f32 %v278, 0.0
    %v337 = vmax.f32 %v283, 0.0
    %v338 = vmax.f32 %v288, 0.0
    %v339 = vmax.f32 %v293, 0.0
    %v340 = vmax.f32 %v298, 0.0
    %v341 = vmax.f32 %v303, 0.0
    %v342 = vmax.f32 %v308, 0.0
    %v343 = vmax.f32 %v313, 0.0
    %v344 = vmax.f32 %v318, 0.0
    %v345 = vmax.f32 %v323, 0.0
    %v346 = vmax.f32 %v328, 0.0
    %v347 = vld [vmem:[%s3] sm:$0x3]
    %v348 = vld [vmem:[%s4] sm:$0x3]
    %350 = vset.pattern.permute.xlu0 0
    %351 = vperm.xlu0 %350, %v348
    %v352 = vpop.permute.xlu0 %351
    %354 = vmatprep.subr.mxu0 0.0
    %355 = vmatpush1.msra.mxu0 %v346
    %356 = vmatprep.subr.mxu0 0.0
    %357 = vmatpush1.msra.mxu0 %v345
    %358 = vmatprep.subr.mxu0 0.0
    %359 = vmatpush1.msra.mxu0 %v344
    %360 = vmatprep.subr.mxu0 0.0
    %361 = vmatpush1.msra.mxu0 %v343
    %362 = vmatprep.subr.mxu0 0.0
    %363 = vmatpush1.msra.mxu0 %v342
    %364 = vmatprep.subr.mxu0 0.0
    %365 = vmatpush1.msra.mxu0 %v341
    %366 = vmatprep.subr.mxu0 0.0
    %367 = vmatpush1.msra.mxu0 %v340
    %368 = vmatprep.subr.mxu0 0.0
    %369 = vmatpush1.msra.mxu0 %v339
    %370 = vmatprep.subr.mxu0 0.0
    %371 = vmatpush1.msra.mxu0 %v338
    %372 = vmatprep.subr.mxu0 0.0
    %373 = vmatpush1.msra.mxu0 %v337
    %374 = vmatprep.subr.mxu0 0.0
    %375 = vmatpush1.msra.mxu0 %v336
    %376 = vmatprep.subr.mxu0 0.0
    %377 = vmatpush1.msra.mxu0 %v335
    %378 = vmatprep.subr.mxu0 0.0
    %379 = vmatpush1.msra.mxu0 %v334
    %380 = vmatprep.subr.mxu0 0.0
    %381 = vmatpush1.msra.mxu0 %v333
    %382 = vmatprep.subr.mxu0 0.0
    %383 = vmatpush1.msra.mxu0 %v332
    %384 = vmatprep.subr.mxu0 0.0
    %385 = vmatpush1.msra.mxu0 %v331
    %386 = vmatprep.subr.mxu0 0.0
    %387 = vmatpush2.msra.mxu0 0.0
    %388 = vmatprep.subr.mxu0 0.0
    %389 = vmatpush2.msra.mxu0 0.0
    %390 = vmatprep.subr.mxu0 0.0
    %391 = vmatpush2.msra.mxu0 0.0
    %392 = vmatprep.subr.mxu0 0.0
    %393 = vmatpush2.msra.mxu0 0.0
    %394 = vmatprep.subr.mxu0 0.0
    %395 = vmatpush2.msra.mxu0 0.0
    %396 = vmatprep.subr.mxu0 0.0
    %397 = vmatpush2.msra.mxu0 0.0
    %398 = vmatprep.subr.mxu0 0.0
    %399 = vmatpush2.msra.mxu0 0.0
    %400 = vmatprep.subr.mxu0 0.0
    %401 = vmatpush2.msra.mxu0 0.0
    %402 = vmatprep.subr.mxu0 0.0
    %403 = vmatpush2.msra.mxu0 0.0
    %404 = vmatprep.subr.mxu0 0.0
    %405 = vmatpush2.msra.mxu0 0.0
    %406 = vmatprep.subr.mxu0 0.0
    %407 = vmatpush2.msra.mxu0 0.0
    %408 = vmatprep.subr.mxu0 0.0
    %409 = vmatpush2.msra.mxu0 0.0
    %410 = vmatprep.subr.mxu0 0.0
    %411 = vmatpush2.msra.mxu0 0.0
    %412 = vmatprep.subr.mxu0 0.0
    %413 = vmatpush2.msra.mxu0 0.0
    %414 = vmatprep.subr.mxu0 0.0
    %415 = vmatpush2.msra.mxu0 0.0
    %416 = vmatprep.subr.mxu0 0.0
    %417 = vmatpush2.msra.mxu0 0.0
    %418 = vmatprep.mubr.f32.mxu0 0.0
    %419 = vmatmul.mubr.f32.gmra.mxu0 %v347
    %v420 = vpop.f32.mrf.mxu0
    %v421 = vadd.f32 %v352, %v420
    %v422 = vpop.f32.mrf.mxu0
    %423 = vdwg.mxu0
    %vm424 = vcmask 58368
    %v425 = vsel %vm424, %v421, -inf
    %v426 = vrot.slane %v425, 4
    %v427 = vmax.f32 %v425, %v426
    %v428 = vrot.slane %v427, 2
    %v429 = vmax.f32 %v427, %v428
    %v430 = vrot.slane %v429, 1
    %v431 = vmax.f32 %v429, %v430
    %v432 = vsub.f32 %v421, %v431
    %v433 = vmul.f32 %v432, 1.442695
    %v434 = vpow.pop %v433
    %v435 = vsel %vm424, %v434, 0.0
    %v436 = vrot.slane %v435, 4
    %v437 = vadd.f32 %v435, %v436
    %v438 = vrot.slane %v437, 2
    %v439 = vadd.f32 %v437, %v438
    %v440 = vrot.slane %v439, 1
    %v441 = vadd.f32 %v439, %v440
    %v442 = vrcp.pop %v441
    %v443 = vmul.f32 %v434, %v442
    %444 = vst.msk [vmem:[#allocation2] sm:$0x3] %vm424, %v443
    // Predicated region
    $region22: #{policy_forward.1} parent=1 // pred_check
      _
    $region23: #{policy_forward.1} parent=1 // pred_check_branch
      %446 = sbr.rel (0) target = $region25
    $region24: #{policy_forward.1} parent=1 // pred_region
      %s448 = ssub.s32 32, 32
      %449 = vsyncadd [#allocation3], %s448
      %s451 = sshll.u32 [#allocation2], 4
      %s452 = int_to_ptr.vmem [resolvable:$true] %s451
      %454 = dma.vmem_to_hbm [thread:$0]  %s452, 32, %s5, [#allocation3]
    $region25: #{policy_forward.1} parent=1 // pred_fallthru
      _
    // Predicated region
    $region26: #{policy_forward.1} parent=1 // pred_check
      _
    $region27: #{policy_forward.1} parent=1 // pred_check_branch
      %456 = sbr.rel (0) target = $region29
    $region28: #{policy_forward.1} parent=1 // pred_region
      %457 = dma.done [#allocation3], 32
    $region29: #{policy_forward.1} parent=1 // pred_fallthru
      _
    %458 = vsyncpa [#allocation3], 1

</llo_original>
